<compile_context>
chip_gen: v5e
topology: v5e:2x2
jax: 0.10.0
libtpu: 0.0.40
codegen_flags: <defaults>
</compile_context>

<pallas_src>
import functools

import jax
import jax.numpy as jnp
import numpy as np
from jax import lax
from jax.experimental import pallas as pl
from jax.experimental.pallas import tpu as pltpu


def _lstm_embed_kernel(x_ref, wih_t_ref, whh_t_ref, b_g_ref, wemb_t_ref,
                       b_emb_ref, out_ref, pg_sc, hall_sc, *, seq_len, batch):
    """x_ref: (T*b, nIn); out_ref: (T*b, nOut); pg_sc: (T*b, 4H); hall_sc: (T*b, H)."""
    H = hall_sc.shape[-1]

    # ---- Phase A (parallel over time): hoisted input projection ------------
    # One big matmul instead of T tiny ones inside the serial recurrence.
    pg_sc[...] = (jnp.dot(x_ref[...], wih_t_ref[...],
                          preferred_element_type=jnp.float32)
                  + b_g_ref[...])

    # ---- Phase B (serial recurrence over T) ---------------------------------
    whh_t = whh_t_ref[...]                      # (H, 4H), kept resident in vregs
    # Lane mask for the "g" gate block [2H, 3H): one sigmoid + one tanh over the
    # full (b, 4H) tile, then select -- instead of 4 sliced EUP calls per step.
    lane = lax.broadcasted_iota(jnp.int32, (batch, 4 * H), 1)
    g_mask = (lane >= 2 * H) & (lane < 3 * H)

    def step(t, carry):
        h_prev, c_prev = carry
        row = pl.multiple_of(t * batch, batch)
        gates = (pg_sc[pl.ds(row, batch), :]
                 + jnp.dot(h_prev, whh_t, preferred_element_type=jnp.float32))
        act = jnp.where(g_mask, jnp.tanh(gates), jax.nn.sigmoid(gates))
        # PyTorch gate order [i, f, g, o]
        i_g = act[:, 0 * H:1 * H]
        f_g = act[:, 1 * H:2 * H]
        g_g = act[:, 2 * H:3 * H]
        o_g = act[:, 3 * H:4 * H]
        c_new = f_g * c_prev + i_g * g_g
        h_new = o_g * jnp.tanh(c_new)
        hall_sc[pl.ds(row, batch), :] = h_new
        return h_new, c_new

    h0 = jnp.zeros((batch, H), jnp.float32)
    c0 = jnp.zeros((batch, H), jnp.float32)
    lax.fori_loop(0, seq_len, step, (h0, c0), unroll=True)

    # ---- Phase C (parallel over time): hoisted embedding Linear -------------
    out_ref[...] = (jnp.dot(hall_sc[...], wemb_t_ref[...],
                            preferred_element_type=jnp.float32)
                    + b_emb_ref[...]).astype(out_ref.dtype)


def bidirectional_lstm_forward(x, params):
    """x: (T, b, nIn) float32.  Returns (T, b, nOut) float32."""
    T, b, n_in = x.shape
    w_ih, w_hh, b_ih, b_hh, w_emb, b_emb = (
        params["w_ih"], params["w_hh"], params["b_ih"], params["b_hh"],
        params["w_emb"], params["b_emb"])
    four_h = w_ih.shape[0]
    H = four_h // 4
    n_out = w_emb.shape[0]

    # Layout glue (cheap XLA ops): pre-transpose weights, pre-sum LSTM biases,
    # flatten (T, b) -> T*b so the kernel works purely on 2D tiles.
    w_ih_t = w_ih.T                       # (nIn, 4H)
    w_hh_t = w_hh.T                       # (H, 4H)
    w_emb_t = w_emb.T                     # (H, nOut)
    b_g = (b_ih + b_hh).reshape(1, four_h)
    b_emb2 = b_emb.reshape(1, n_out)
    x2 = x.reshape(T * b, n_in)

    kernel = functools.partial(_lstm_embed_kernel, seq_len=T, batch=b)

    out2 = pl.pallas_call(
        kernel,
        out_shape=jax.ShapeDtypeStruct((T * b, n_out), jnp.float32),
        # No grid: everything (a few KiB) lives in VMEM for the whole call.
        in_specs=[pl.BlockSpec(memory_space=pltpu.MemorySpace.VMEM)] * 6,
        out_specs=pl.BlockSpec(memory_space=pltpu.MemorySpace.VMEM),
        scratch_shapes=[
            pltpu.VMEM((T * b, four_h), jnp.float32),   # pre-gates (phase A)
            pltpu.VMEM((T * b, H), jnp.float32),        # all hidden states
        ],
    )(x2, w_ih_t, w_hh_t, b_g, w_emb_t, b_emb2)

    return out2.reshape(T, b, n_out)


def _reference_forward(x, params):
    """Pure-JAX reference (PyTorch LSTM semantics, zero initial state)."""
    w_ih, w_hh, b_ih, b_hh, w_emb, b_emb = (
        params["w_ih"], params["w_hh"], params["b_ih"], params["b_hh"],
        params["w_emb"], params["b_emb"])
    H = w_hh.shape[1]
    T, b, _ = x.shape

    def step(carry, x_t):
        h, c = carry
        gates = x_t @ w_ih.T + h @ w_hh.T + b_ih + b_hh
        i = jax.nn.sigmoid(gates[:, 0 * H:1 * H])
        f = jax.nn.sigmoid(gates[:, 1 * H:2 * H])
        g = jnp.tanh(gates[:, 2 * H:3 * H])
        o = jax.nn.sigmoid(gates[:, 3 * H:4 * H])
        c_new = f * c + i * g
        h_new = o * jnp.tanh(c_new)
        return (h_new, c_new), h_new

    h0 = jnp.zeros((b, H), jnp.float32)
    c0 = jnp.zeros((b, H), jnp.float32)
    _, hs = lax.scan(step, (h0, c0), x)          # (T, b, H)
    return hs @ w_emb.T + b_emb                  # (T, b, nOut)


def init_params(key, n_in, n_hidden, n_out):
    """Deterministic synthetic init matching nn.LSTM / nn.Linear param shapes."""
    ks = jax.random.split(key, 6)
    s_lstm = 1.0 / np.sqrt(n_hidden)
    s_lin = 1.0 / np.sqrt(n_hidden)
    return {
        "w_ih": jax.random.uniform(ks[0], (4 * n_hidden, n_in), jnp.float32,
                                   -s_lstm, s_lstm),
        "w_hh": jax.random.uniform(ks[1], (4 * n_hidden, n_hidden), jnp.float32,
                                   -s_lstm, s_lstm),
        "b_ih": jax.random.uniform(ks[2], (4 * n_hidden,), jnp.float32,
                                   -s_lstm, s_lstm),
        "b_hh": jax.random.uniform(ks[3], (4 * n_hidden,), jnp.float32,
                                   -s_lstm, s_lstm),
        "w_emb": jax.random.uniform(ks[4], (n_out, n_hidden), jnp.float32,
                                    -s_lin, s_lin),
        "b_emb": jax.random.uniform(ks[5], (n_out,), jnp.float32,
                                    -s_lin, s_lin),
    }


if __name__ == "__main__":
    T, B, N_IN, N_HIDDEN, N_OUT = 8, 2, 16, 32, 16

    key = jax.random.PRNGKey(0)
    k_x, k_p = jax.random.split(key)
    x = jax.random.normal(k_x, (T, B, N_IN), jnp.float32)   # (T, b, nIn)
    params = init_params(k_p, N_IN, N_HIDDEN, N_OUT)

    out = bidirectional_lstm_forward(x, params)
    out = jax.block_until_ready(out)

    ref = jax.block_until_ready(_reference_forward(x, params))
    np.testing.assert_allclose(np.asarray(out), np.asarray(ref),
                               rtol=1e-5, atol=1e-5)

    print("KERNEL_OK")
</pallas_src>

<mosaic_0001>
module attributes {stable_mosaic.version = 11 : i64} {
  func.func @_lstm_embed_kernel(%arg0: memref<16x16xf32, #tpu.memory_space<vmem>>, %arg1: memref<16x128xf32, #tpu.memory_space<vmem>>, %arg2: memref<32x128xf32, #tpu.memory_space<vmem>>, %arg3: memref<1x128xf32, #tpu.memory_space<vmem>>, %arg4: memref<32x16xf32, #tpu.memory_space<vmem>>, %arg5: memref<1x16xf32, #tpu.memory_space<vmem>>, %arg6: memref<16x16xf32, #tpu.memory_space<vmem>>, %arg7: memref<16x128xf32, #tpu.memory_space<vmem>>, %arg8: memref<16x32xf32, #tpu.memory_space<vmem>>) attributes {dimension_semantics = [], scalar_prefetch = 0 : i64, scratch_operands = 2 : i64, tpu.core_type = #tpu.core_type<tc>} {
    %c0 = arith.constant 0 : index
    %c0_0 = arith.constant 0 : index
    %0 = vector.load %arg0[%c0, %c0_0] : memref<16x16xf32, #tpu.memory_space<vmem>>, vector<16x16xf32>
    %c0_1 = arith.constant 0 : index
    %c0_2 = arith.constant 0 : index
    %1 = vector.load %arg1[%c0_1, %c0_2] : memref<16x128xf32, #tpu.memory_space<vmem>>, vector<16x128xf32>
    %cst = arith.constant dense<0.000000e+00> : vector<16x128xf32>
    %2 = tpu.matmul %0, %1, %cst {dimension_numbers = #tpu.dot_dimension_numbers<[1], [0], [0], [1], [0, 0, 1, 1], [], []>} : vector<16x16xf32>, vector<16x128xf32>, vector<16x128xf32> -> vector<16x128xf32>
    %c0_3 = arith.constant 0 : index
    %c0_4 = arith.constant 0 : index
    %3 = vector.load %arg3[%c0_3, %c0_4] : memref<1x128xf32, #tpu.memory_space<vmem>>, vector<1x128xf32>
    %4 = vector.broadcast %3 : vector<1x128xf32> to vector<16x128xf32>
    %5 = arith.addf %2, %4 : vector<16x128xf32>
    %c0_5 = arith.constant 0 : index
    %c0_6 = arith.constant 0 : index
    %6 = vector.load %arg7[%c0_5, %c0_6] : memref<16x128xf32, #tpu.memory_space<vmem>>, vector<16x128xf32>
    tpu.vector_store %arg7[%c0_5, %c0_6], %5 {strides = array<i32>} : memref<16x128xf32, #tpu.memory_space<vmem>>, vector<16x128xf32>,
    %c0_7 = arith.constant 0 : index
    %c0_8 = arith.constant 0 : index
    %7 = vector.load %arg2[%c0_7, %c0_8] : memref<32x128xf32, #tpu.memory_space<vmem>>, vector<32x128xf32>
    %8 = tpu.iota {dimensions = array<i32: 1>} : vector<2x128xi32>
    %c64_i32 = arith.constant 64 : i32
    %9 = vector.broadcast %c64_i32 : i32 to vector<2x128xi32>
    %10 = arith.cmpi sge, %8, %9 : vector<2x128xi32>
    %c96_i32 = arith.constant 96 : i32
    %11 = vector.broadcast %c96_i32 : i32 to vector<2x128xi32>
    %12 = arith.cmpi slt, %8, %11 : vector<2x128xi32>
    %13 = arith.andi %10, %12 : vector<2x128xi1>
    %cst_9 = arith.constant 0.000000e+00 : f32
    %14 = vector.broadcast %cst_9 : f32 to vector<2x32xf32>
    %cst_10 = arith.constant 0.000000e+00 : f32
    %15 = vector.broadcast %cst_10 : f32 to vector<2x32xf32>
    %c0_i32 = arith.constant 0 : i32
    %c2_i32 = arith.constant 2 : i32
    %16 = arith.muli %c0_i32, %c2_i32 : i32
    %17 = tpu.assume_multiple %16, 2 : i32
    %18 = arith.index_cast %17 : i32 to index
    %c0_11 = arith.constant 0 : index
    %19 = vector.load %arg7[%18, %c0_11] : memref<16x128xf32, #tpu.memory_space<vmem>>, vector<2x128xf32>
    %cst_12 = arith.constant dense<0.000000e+00> : vector<2x128xf32>
    %20 = tpu.matmul %14, %7, %cst_12 {dimension_numbers = #tpu.dot_dimension_numbers<[1], [0], [0], [1], [0, 0, 1, 1], [], []>} : vector<2x32xf32>, vector<32x128xf32>, vector<2x128xf32> -> vector<2x128xf32>
    %21 = arith.addf %19, %20 : vector<2x128xf32>
    %22 = math.tanh %21 : vector<2x128xf32>
    %23 = arith.negf %21 : vector<2x128xf32>
    %24 = math.exp %23 : vector<2x128xf32>
    %cst_13 = arith.constant 1.000000e+00 : f32
    %25 = vector.broadcast %cst_13 : f32 to vector<2x128xf32>
    %26 = arith.addf %25, %24 : vector<2x128xf32>
    %27 = arith.divf %25, %26 : vector<2x128xf32>
    %28 = arith.select %13, %22, %27 : vector<2x128xi1>, vector<2x128xf32>
    %29 = vector.extract_strided_slice %28 {offsets = [0, 0], sizes = [2, 32], strides = [1, 1]} : vector<2x128xf32> to vector<2x32xf32>
    %30 = vector.extract_strided_slice %28 {offsets = [0, 32], sizes = [2, 32], strides = [1, 1]} : vector<2x128xf32> to vector<2x32xf32>
    %31 = vector.extract_strided_slice %28 {offsets = [0, 64], sizes = [2, 32], strides = [1, 1]} : vector<2x128xf32> to vector<2x32xf32>
    %32 = vector.extract_strided_slice %28 {offsets = [0, 96], sizes = [2, 32], strides = [1, 1]} : vector<2x128xf32> to vector<2x32xf32>
    %33 = arith.mulf %30, %15 : vector<2x32xf32>
    %34 = arith.mulf %29, %31 : vector<2x32xf32>
    %35 = arith.addf %33, %34 : vector<2x32xf32>
    %36 = math.tanh %35 : vector<2x32xf32>
    %37 = arith.mulf %32, %36 : vector<2x32xf32>
    %38 = arith.index_cast %17 : i32 to index
    %c0_14 = arith.constant 0 : index
    %39 = vector.load %arg8[%38, %c0_14] : memref<16x32xf32, #tpu.memory_space<vmem>>, vector<2x32xf32>
    tpu.vector_store %arg8[%38, %c0_14], %37 {strides = array<i32>} : memref<16x32xf32, #tpu.memory_space<vmem>>, vector<2x32xf32>,
    %c1_i32 = arith.constant 1 : i32
    %c2_i32_15 = arith.constant 2 : i32
    %40 = arith.muli %c1_i32, %c2_i32_15 : i32
    %41 = tpu.assume_multiple %40, 2 : i32
    %42 = arith.index_cast %41 : i32 to index
    %c0_16 = arith.constant 0 : index
    %43 = vector.load %arg7[%42, %c0_16] : memref<16x128xf32, #tpu.memory_space<vmem>>, vector<2x128xf32>
    %cst_17 = arith.constant dense<0.000000e+00> : vector<2x128xf32>
    %44 = tpu.matmul %37, %7, %cst_17 {dimension_numbers = #tpu.dot_dimension_numbers<[1], [0], [0], [1], [0, 0, 1, 1], [], []>} : vector<2x32xf32>, vector<32x128xf32>, vector<2x128xf32> -> vector<2x128xf32>
    %45 = arith.addf %43, %44 : vector<2x128xf32>
    %46 = math.tanh %45 : vector<2x128xf32>
    %47 = arith.negf %45 : vector<2x128xf32>
    %48 = math.exp %47 : vector<2x128xf32>
    %cst_18 = arith.constant 1.000000e+00 : f32
    %49 = vector.broadcast %cst_18 : f32 to vector<2x128xf32>
    %50 = arith.addf %49, %48 : vector<2x128xf32>
    %51 = arith.divf %49, %50 : vector<2x128xf32>
    %52 = arith.select %13, %46, %51 : vector<2x128xi1>, vector<2x128xf32>
    %53 = vector.extract_strided_slice %52 {offsets = [0, 0], sizes = [2, 32], strides = [1, 1]} : vector<2x128xf32> to vector<2x32xf32>
    %54 = vector.extract_strided_slice %52 {offsets = [0, 32], sizes = [2, 32], strides = [1, 1]} : vector<2x128xf32> to vector<2x32xf32>
    %55 = vector.extract_strided_slice %52 {offsets = [0, 64], sizes = [2, 32], strides = [1, 1]} : vector<2x128xf32> to vector<2x32xf32>
    %56 = vector.extract_strided_slice %52 {offsets = [0, 96], sizes = [2, 32], strides = [1, 1]} : vector<2x128xf32> to vector<2x32xf32>
    %57 = arith.mulf %54, %35 : vector<2x32xf32>
    %58 = arith.mulf %53, %55 : vector<2x32xf32>
    %59 = arith.addf %57, %58 : vector<2x32xf32>
    %60 = math.tanh %59 : vector<2x32xf32>
    %61 = arith.mulf %56, %60 : vector<2x32xf32>
    %62 = arith.index_cast %41 : i32 to index
    %c0_19 = arith.constant 0 : index
    %63 = vector.load %arg8[%62, %c0_19] : memref<16x32xf32, #tpu.memory_space<vmem>>, vector<2x32xf32>
    tpu.vector_store %arg8[%62, %c0_19], %61 {strides = array<i32>} : memref<16x32xf32, #tpu.memory_space<vmem>>, vector<2x32xf32>,
    %c2_i32_20 = arith.constant 2 : i32
    %c2_i32_21 = arith.constant 2 : i32
    %64 = arith.muli %c2_i32_20, %c2_i32_21 : i32
    %65 = tpu.assume_multiple %64, 2 : i32
    %66 = arith.index_cast %65 : i32 to index
    %c0_22 = arith.constant 0 : index
    %67 = vector.load %arg7[%66, %c0_22] : memref<16x128xf32, #tpu.memory_space<vmem>>, vector<2x128xf32>
    %cst_23 = arith.constant dense<0.000000e+00> : vector<2x128xf32>
    %68 = tpu.matmul %61, %7, %cst_23 {dimension_numbers = #tpu.dot_dimension_numbers<[1], [0], [0], [1], [0, 0, 1, 1], [], []>} : vector<2x32xf32>, vector<32x128xf32>, vector<2x128xf32> -> vector<2x128xf32>
    %69 = arith.addf %67, %68 : vector<2x128xf32>
    %70 = math.tanh %69 : vector<2x128xf32>
    %71 = arith.negf %69 : vector<2x128xf32>
    %72 = math.exp %71 : vector<2x128xf32>
    %cst_24 = arith.constant 1.000000e+00 : f32
    %73 = vector.broadcast %cst_24 : f32 to vector<2x128xf32>
    %74 = arith.addf %73, %72 : vector<2x128xf32>
    %75 = arith.divf %73, %74 : vector<2x128xf32>
    %76 = arith.select %13, %70, %75 : vector<2x128xi1>, vector<2x128xf32>
    %77 = vector.extract_strided_slice %76 {offsets = [0, 0], sizes = [2, 32], strides = [1, 1]} : vector<2x128xf32> to vector<2x32xf32>
    %78 = vector.extract_strided_slice %76 {offsets = [0, 32], sizes = [2, 32], strides = [1, 1]} : vector<2x128xf32> to vector<2x32xf32>
    %79 = vector.extract_strided_slice %76 {offsets = [0, 64], sizes = [2, 32], strides = [1, 1]} : vector<2x128xf32> to vector<2x32xf32>
    %80 = vector.extract_strided_slice %76 {offsets = [0, 96], sizes = [2, 32], strides = [1, 1]} : vector<2x128xf32> to vector<2x32xf32>
    %81 = arith.mulf %78, %59 : vector<2x32xf32>
    %82 = arith.mulf %77, %79 : vector<2x32xf32>
    %83 = arith.addf %81, %82 : vector<2x32xf32>
    %84 = math.tanh %83 : vector<2x32xf32>
    %85 = arith.mulf %80, %84 : vector<2x32xf32>
    %86 = arith.index_cast %65 : i32 to index
    %c0_25 = arith.constant 0 : index
    %87 = vector.load %arg8[%86, %c0_25] : memref<16x32xf32, #tpu.memory_space<vmem>>, vector<2x32xf32>
    tpu.vector_store %arg8[%86, %c0_25], %85 {strides = array<i32>} : memref<16x32xf32, #tpu.memory_space<vmem>>, vector<2x32xf32>,
    %c3_i32 = arith.constant 3 : i32
    %c2_i32_26 = arith.constant 2 : i32
    %88 = arith.muli %c3_i32, %c2_i32_26 : i32
    %89 = tpu.assume_multiple %88, 2 : i32
    %90 = arith.index_cast %89 : i32 to index
    %c0_27 = arith.constant 0 : index
    %91 = vector.load %arg7[%90, %c0_27] : memref<16x128xf32, #tpu.memory_space<vmem>>, vector<2x128xf32>
    %cst_28 = arith.constant dense<0.000000e+00> : vector<2x128xf32>
    %92 = tpu.matmul %85, %7, %cst_28 {dimension_numbers = #tpu.dot_dimension_numbers<[1], [0], [0], [1], [0, 0, 1, 1], [], []>} : vector<2x32xf32>, vector<32x128xf32>, vector<2x128xf32> -> vector<2x128xf32>
    %93 = arith.addf %91, %92 : vector<2x128xf32>
    %94 = math.tanh %93 : vector<2x128xf32>
    %95 = arith.negf %93 : vector<2x128xf32>
    %96 = math.exp %95 : vector<2x128xf32>
    %cst_29 = arith.constant 1.000000e+00 : f32
    %97 = vector.broadcast %cst_29 : f32 to vector<2x128xf32>
    %98 = arith.addf %97, %96 : vector<2x128xf32>
    %99 = arith.divf %97, %98 : vector<2x128xf32>
    %100 = arith.select %13, %94, %99 : vector<2x128xi1>, vector<2x128xf32>
    %101 = vector.extract_strided_slice %100 {offsets = [0, 0], sizes = [2, 32], strides = [1, 1]} : vector<2x128xf32> to vector<2x32xf32>
    %102 = vector.extract_strided_slice %100 {offsets = [0, 32], sizes = [2, 32], strides = [1, 1]} : vector<2x128xf32> to vector<2x32xf32>
    %103 = vector.extract_strided_slice %100 {offsets = [0, 64], sizes = [2, 32], strides = [1, 1]} : vector<2x128xf32> to vector<2x32xf32>
    %104 = vector.extract_strided_slice %100 {offsets = [0, 96], sizes = [2, 32], strides = [1, 1]} : vector<2x128xf32> to vector<2x32xf32>
    %105 = arith.mulf %102, %83 : vector<2x32xf32>
    %106 = arith.mulf %101, %103 : vector<2x32xf32>
    %107 = arith.addf %105, %106 : vector<2x32xf32>
    %108 = math.tanh %107 : vector<2x32xf32>
    %109 = arith.mulf %104, %108 : vector<2x32xf32>
    %110 = arith.index_cast %89 : i32 to index
    %c0_30 = arith.constant 0 : index
    %111 = vector.load %arg8[%110, %c0_30] : memref<16x32xf32, #tpu.memory_space<vmem>>, vector<2x32xf32>
    tpu.vector_store %arg8[%110, %c0_30], %109 {strides = array<i32>} : memref<16x32xf32, #tpu.memory_space<vmem>>, vector<2x32xf32>,
    %c4_i32 = arith.constant 4 : i32
    %c2_i32_31 = arith.constant 2 : i32
    %112 = arith.muli %c4_i32, %c2_i32_31 : i32
    %113 = tpu.assume_multiple %112, 2 : i32
    %114 = arith.index_cast %113 : i32 to index
    %c0_32 = arith.constant 0 : index
    %115 = vector.load %arg7[%114, %c0_32] : memref<16x128xf32, #tpu.memory_space<vmem>>, vector<2x128xf32>
    %cst_33 = arith.constant dense<0.000000e+00> : vector<2x128xf32>
    %116 = tpu.matmul %109, %7, %cst_33 {dimension_numbers = #tpu.dot_dimension_numbers<[1], [0], [0], [1], [0, 0, 1, 1], [], []>} : vector<2x32xf32>, vector<32x128xf32>, vector<2x128xf32> -> vector<2x128xf32>
    %117 = arith.addf %115, %116 : vector<2x128xf32>
    %118 = math.tanh %117 : vector<2x128xf32>
    %119 = arith.negf %117 : vector<2x128xf32>
    %120 = math.exp %119 : vector<2x128xf32>
    %cst_34 = arith.constant 1.000000e+00 : f32
    %121 = vector.broadcast %cst_34 : f32 to vector<2x128xf32>
    %122 = arith.addf %121, %120 : vector<2x128xf32>
    %123 = arith.divf %121, %122 : vector<2x128xf32>
    %124 = arith.select %13, %118, %123 : vector<2x128xi1>, vector<2x128xf32>
    %125 = vector.extract_strided_slice %124 {offsets = [0, 0], sizes = [2, 32], strides = [1, 1]} : vector<2x128xf32> to vector<2x32xf32>
    %126 = vector.extract_strided_slice %124 {offsets = [0, 32], sizes = [2, 32], strides = [1, 1]} : vector<2x128xf32> to vector<2x32xf32>
    %127 = vector.extract_strided_slice %124 {offsets = [0, 64], sizes = [2, 32], strides = [1, 1]} : vector<2x128xf32> to vector<2x32xf32>
    %128 = vector.extract_strided_slice %124 {offsets = [0, 96], sizes = [2, 32], strides = [1, 1]} : vector<2x128xf32> to vector<2x32xf32>
    %129 = arith.mulf %126, %107 : vector<2x32xf32>
    %130 = arith.mulf %125, %127 : vector<2x32xf32>
    %131 = arith.addf %129, %130 : vector<2x32xf32>
    %132 = math.tanh %131 : vector<2x32xf32>
    %133 = arith.mulf %128, %132 : vector<2x32xf32>
    %134 = arith.index_cast %113 : i32 to index
    %c0_35 = arith.constant 0 : index
    %135 = vector.load %arg8[%134, %c0_35] : memref<16x32xf32, #tpu.memory_space<vmem>>, vector<2x32xf32>
    tpu.vector_store %arg8[%134, %c0_35], %133 {strides = array<i32>} : memref<16x32xf32, #tpu.memory_space<vmem>>, vector<2x32xf32>,
    %c5_i32 = arith.constant 5 : i32
    %c2_i32_36 = arith.constant 2 : i32
    %136 = arith.muli %c5_i32, %c2_i32_36 : i32
    %137 = tpu.assume_multiple %136, 2 : i32
    %138 = arith.index_cast %137 : i32 to index
    %c0_37 = arith.constant 0 : index
    %139 = vector.load %arg7[%138, %c0_37] : memref<16x128xf32, #tpu.memory_space<vmem>>, vector<2x128xf32>
    %cst_38 = arith.constant dense<0.000000e+00> : vector<2x128xf32>
    %140 = tpu.matmul %133, %7, %cst_38 {dimension_numbers = #tpu.dot_dimension_numbers<[1], [0], [0], [1], [0, 0, 1, 1], [], []>} : vector<2x32xf32>, vector<32x128xf32>, vector<2x128xf32> -> vector<2x128xf32>
    %141 = arith.addf %139, %140 : vector<2x128xf32>
    %142 = math.tanh %141 : vector<2x128xf32>
    %143 = arith.negf %141 : vector<2x128xf32>
    %144 = math.exp %143 : vector<2x128xf32>
    %cst_39 = arith.constant 1.000000e+00 : f32
    %145 = vector.broadcast %cst_39 : f32 to vector<2x128xf32>
    %146 = arith.addf %145, %144 : vector<2x128xf32>
    %147 = arith.divf %145, %146 : vector<2x128xf32>
    %148 = arith.select %13, %142, %147 : vector<2x128xi1>, vector<2x128xf32>
    %149 = vector.extract_strided_slice %148 {offsets = [0, 0], sizes = [2, 32], strides = [1, 1]} : vector<2x128xf32> to vector<2x32xf32>
    %150 = vector.extract_strided_slice %148 {offsets = [0, 32], sizes = [2, 32], strides = [1, 1]} : vector<2x128xf32> to vector<2x32xf32>
    %151 = vector.extract_strided_slice %148 {offsets = [0, 64], sizes = [2, 32], strides = [1, 1]} : vector<2x128xf32> to vector<2x32xf32>
    %152 = vector.extract_strided_slice %148 {offsets = [0, 96], sizes = [2, 32], strides = [1, 1]} : vector<2x128xf32> to vector<2x32xf32>
    %153 = arith.mulf %150, %131 : vector<2x32xf32>
    %154 = arith.mulf %149, %151 : vector<2x32xf32>
    %155 = arith.addf %153, %154 : vector<2x32xf32>
    %156 = math.tanh %155 : vector<2x32xf32>
    %157 = arith.mulf %152, %156 : vector<2x32xf32>
    %158 = arith.index_cast %137 : i32 to index
    %c0_40 = arith.constant 0 : index
    %159 = vector.load %arg8[%158, %c0_40] : memref<16x32xf32, #tpu.memory_space<vmem>>, vector<2x32xf32>
    tpu.vector_store %arg8[%158, %c0_40], %157 {strides = array<i32>} : memref<16x32xf32, #tpu.memory_space<vmem>>, vector<2x32xf32>,
    %c6_i32 = arith.constant 6 : i32
    %c2_i32_41 = arith.constant 2 : i32
    %160 = arith.muli %c6_i32, %c2_i32_41 : i32
    %161 = tpu.assume_multiple %160, 2 : i32
    %162 = arith.index_cast %161 : i32 to index
    %c0_42 = arith.constant 0 : index
    %163 = vector.load %arg7[%162, %c0_42] : memref<16x128xf32, #tpu.memory_space<vmem>>, vector<2x128xf32>
    %cst_43 = arith.constant dense<0.000000e+00> : vector<2x128xf32>
    %164 = tpu.matmul %157, %7, %cst_43 {dimension_numbers = #tpu.dot_dimension_numbers<[1], [0], [0], [1], [0, 0, 1, 1], [], []>} : vector<2x32xf32>, vector<32x128xf32>, vector<2x128xf32> -> vector<2x128xf32>
    %165 = arith.addf %163, %164 : vector<2x128xf32>
    %166 = math.tanh %165 : vector<2x128xf32>
    %167 = arith.negf %165 : vector<2x128xf32>
    %168 = math.exp %167 : vector<2x128xf32>
    %cst_44 = arith.constant 1.000000e+00 : f32
    %169 = vector.broadcast %cst_44 : f32 to vector<2x128xf32>
    %170 = arith.addf %169, %168 : vector<2x128xf32>
    %171 = arith.divf %169, %170 : vector<2x128xf32>
    %172 = arith.select %13, %166, %171 : vector<2x128xi1>, vector<2x128xf32>
    %173 = vector.extract_strided_slice %172 {offsets = [0, 0], sizes = [2, 32], strides = [1, 1]} : vector<2x128xf32> to vector<2x32xf32>
    %174 = vector.extract_strided_slice %172 {offsets = [0, 32], sizes = [2, 32], strides = [1, 1]} : vector<2x128xf32> to vector<2x32xf32>
    %175 = vector.extract_strided_slice %172 {offsets = [0, 64], sizes = [2, 32], strides = [1, 1]} : vector<2x128xf32> to vector<2x32xf32>
    %176 = vector.extract_strided_slice %172 {offsets = [0, 96], sizes = [2, 32], strides = [1, 1]} : vector<2x128xf32> to vector<2x32xf32>
    %177 = arith.mulf %174, %155 : vector<2x32xf32>
    %178 = arith.mulf %173, %175 : vector<2x32xf32>
    %179 = arith.addf %177, %178 : vector<2x32xf32>
    %180 = math.tanh %179 : vector<2x32xf32>
    %181 = arith.mulf %176, %180 : vector<2x32xf32>
    %182 = arith.index_cast %161 : i32 to index
    %c0_45 = arith.constant 0 : index
    %183 = vector.load %arg8[%182, %c0_45] : memref<16x32xf32, #tpu.memory_space<vmem>>, vector<2x32xf32>
    tpu.vector_store %arg8[%182, %c0_45], %181 {strides = array<i32>} : memref<16x32xf32, #tpu.memory_space<vmem>>, vector<2x32xf32>,
    %c7_i32 = arith.constant 7 : i32
    %c2_i32_46 = arith.constant 2 : i32
    %184 = arith.muli %c7_i32, %c2_i32_46 : i32
    %185 = tpu.assume_multiple %184, 2 : i32
    %186 = arith.index_cast %185 : i32 to index
    %c0_47 = arith.constant 0 : index
    %187 = vector.load %arg7[%186, %c0_47] : memref<16x128xf32, #tpu.memory_space<vmem>>, vector<2x128xf32>
    %cst_48 = arith.constant dense<0.000000e+00> : vector<2x128xf32>
    %188 = tpu.matmul %181, %7, %cst_48 {dimension_numbers = #tpu.dot_dimension_numbers<[1], [0], [0], [1], [0, 0, 1, 1], [], []>} : vector<2x32xf32>, vector<32x128xf32>, vector<2x128xf32> -> vector<2x128xf32>
    %189 = arith.addf %187, %188 : vector<2x128xf32>
    %190 = math.tanh %189 : vector<2x128xf32>
    %191 = arith.negf %189 : vector<2x128xf32>
    %192 = math.exp %191 : vector<2x128xf32>
    %cst_49 = arith.constant 1.000000e+00 : f32
    %193 = vector.broadcast %cst_49 : f32 to vector<2x128xf32>
    %194 = arith.addf %193, %192 : vector<2x128xf32>
    %195 = arith.divf %193, %194 : vector<2x128xf32>
    %196 = arith.select %13, %190, %195 : vector<2x128xi1>, vector<2x128xf32>
    %197 = vector.extract_strided_slice %196 {offsets = [0, 0], sizes = [2, 32], strides = [1, 1]} : vector<2x128xf32> to vector<2x32xf32>
    %198 = vector.extract_strided_slice %196 {offsets = [0, 32], sizes = [2, 32], strides = [1, 1]} : vector<2x128xf32> to vector<2x32xf32>
    %199 = vector.extract_strided_slice %196 {offsets = [0, 64], sizes = [2, 32], strides = [1, 1]} : vector<2x128xf32> to vector<2x32xf32>
    %200 = vector.extract_strided_slice %196 {offsets = [0, 96], sizes = [2, 32], strides = [1, 1]} : vector<2x128xf32> to vector<2x32xf32>
    %201 = arith.mulf %198, %179 : vector<2x32xf32>
    %202 = arith.mulf %197, %199 : vector<2x32xf32>
    %203 = arith.addf %201, %202 : vector<2x32xf32>
    %204 = math.tanh %203 : vector<2x32xf32>
    %205 = arith.mulf %200, %204 : vector<2x32xf32>
    %206 = arith.index_cast %185 : i32 to index
    %c0_50 = arith.constant 0 : index
    %207 = vector.load %arg8[%206, %c0_50] : memref<16x32xf32, #tpu.memory_space<vmem>>, vector<2x32xf32>
    tpu.vector_store %arg8[%206, %c0_50], %205 {strides = array<i32>} : memref<16x32xf32, #tpu.memory_space<vmem>>, vector<2x32xf32>,
    %c8_i32 = arith.constant 8 : i32
    %c0_51 = arith.constant 0 : index
    %c0_52 = arith.constant 0 : index
    %208 = vector.load %arg8[%c0_51, %c0_52] : memref<16x32xf32, #tpu.memory_space<vmem>>, vector<16x32xf32>
    %c0_53 = arith.constant 0 : index
    %c0_54 = arith.constant 0 : index
    %209 = vector.load %arg4[%c0_53, %c0_54] : memref<32x16xf32, #tpu.memory_space<vmem>>, vector<32x16xf32>
    %cst_55 = arith.constant dense<0.000000e+00> : vector<16x16xf32>
    %210 = tpu.matmul %208, %209, %cst_55 {dimension_numbers = #tpu.dot_dimension_numbers<[1], [0], [0], [1], [0, 0, 1, 1], [], []>} : vector<16x32xf32>, vector<32x16xf32>, vector<16x16xf32> -> vector<16x16xf32>
    %c0_56 = arith.constant 0 : index
    %c0_57 = arith.constant 0 : index
    %211 = vector.load %arg5[%c0_56, %c0_57] : memref<1x16xf32, #tpu.memory_space<vmem>>, vector<1x16xf32>
    %212 = vector.broadcast %211 : vector<1x16xf32> to vector<16x16xf32>
    %213 = arith.addf %210, %212 : vector<16x16xf32>
    %c0_58 = arith.constant 0 : index
    %c0_59 = arith.constant 0 : index
    %214 = vector.load %arg6[%c0_58, %c0_59] : memref<16x16xf32, #tpu.memory_space<vmem>>, vector<16x16xf32>
    tpu.vector_store %arg6[%c0_58, %c0_59], %213 {strides = array<i32>} : memref<16x16xf32, #tpu.memory_space<vmem>>, vector<16x16xf32>,
    return
  }
}

</mosaic_0001>

<llo_original>
// kernel: tpu_custom_call.1
$region0: #{tpu_custom_call.1}
  #allocation0 [shape = 'u32[]', space=smem, size = 0x4, offset = 0x4, fixed_abs, tag = 'smem constant byte address 0x4 - core index']
  #allocation1 [shape = 'u32[72,128]{1,0:T(1,128)}', space=vmem, size = 0x9000, scoped, tag = 'internal scratch']
  #allocation2 [shape = 'f32[16,128]{1,0:T(8,128)}', space=vmem, size = 0x2000, scoped, tag = 'scratch operand']
  #allocation3 [shape = 'f32[16,32]{1,0:T(8,128)}', space=vmem, size = 0x2000, scoped, tag = 'scratch operand']
  %s0 = inlined_call_operand.vmem [shape: f32[16,16], index: 0, kind: input, shape index: {}]
  %s1 = inlined_call_operand.hbm [shape: f32[16,128], index: 1, kind: input, shape index: {}]
  %s2 = inlined_call_operand.vmem [shape: f32[32,128], index: 2, kind: input, shape index: {}]
  %s3 = inlined_call_operand.vmem [shape: f32[1,128], index: 3, kind: input, shape index: {}]
  %s4 = inlined_call_operand.vmem [shape: f32[32,16], index: 4, kind: input, shape index: {}]
  %s5 = inlined_call_operand.vmem [shape: f32[1,16], index: 5, kind: input, shape index: {}]
  %s6 = inlined_call_operand.hbm [shape: f32[16,16], index: 6, kind: output, shape index: {}]
  %s7 = sld [smem:[#allocation0]]
  $region38: #{tpu_custom_call.1} parent=0
    _
  %s9 = ssub.s32 1, %s7
  %s10 = scalar_select 0, %s9, %s7
  $region1: #{tpu_custom_call.1} parent=0
    #allocation4 [shape = 'u8[8192]{0}', space=vmem, size = 0x2000, scoped, tag = 'input window, operand 1, single buffered']
    #allocation5 [shape = 's32[1]{0}', space=sflag, size = 0x4, scoped, tag = 'scoped memory for tpu_custom_call.1']
    #allocation6 [shape = 's32[1]{0}', space=sflag, size = 0x4, scoped, tag = 'scoped memory for tpu_custom_call.1']
    #allocation7 [shape = 'u8[8192]{0}', space=vmem, size = 0x2000, scoped, tag = 'output window, operand 0, single buffered']
    %11 = vsyncpa [#allocation5], 0
    %12 = vsyncpa [#allocation6], 0
    // Predicated region
    $region2: #{tpu_custom_call.1} parent=1 // pred_check
      _
    $region3: #{tpu_custom_call.1} parent=1 // pred_check_branch
      %14 = sbr.rel (0) target = $region5
    $region4: #{tpu_custom_call.1} parent=1 // pred_region
      _
    $region5: #{tpu_custom_call.1} parent=1 // pred_fallthru
      _
    // Predicated region
    $region6: #{tpu_custom_call.1} parent=1 // pred_check
      _
    $region7: #{tpu_custom_call.1} parent=1 // pred_check_branch
      %16 = sbr.rel (0) target = $region9
    $region8: #{tpu_custom_call.1} parent=1 // pred_region
      %18 = vsyncadd [#allocation5], 0
      %s19 = sshll.u32 %s1, 4
      %s20 = int_to_ptr.hbm [resolvable:$true] %s19
      %s21 = sshll.u32 [#allocation4], 4
      %s22 = int_to_ptr.vmem [resolvable:$true] %s21
      %27 = dma.hbm_to_vmem [thread:$0]  %s20, 256, %s22, [#allocation5], 128, 128, 8
    $region9: #{tpu_custom_call.1} parent=1 // pred_fallthru
      _
    // Predicated region
    $region10: #{tpu_custom_call.1} parent=1 // pred_check
      _
    $region11: #{tpu_custom_call.1} parent=1 // pred_check_branch
      %29 = sbr.rel (0) target = $region13
    $region12: #{tpu_custom_call.1} parent=1 // pred_region
      _
    $region13: #{tpu_custom_call.1} parent=1 // pred_fallthru
      _
    // Predicated region
    $region14: #{tpu_custom_call.1} parent=1 // pred_check
      _
    $region15: #{tpu_custom_call.1} parent=1 // pred_check_branch
      %31 = sbr.rel (0) target = $region17
    $region16: #{tpu_custom_call.1} parent=1 // pred_region
      _
    $region17: #{tpu_custom_call.1} parent=1 // pred_fallthru
      _
    // Predicated region
    $region18: #{tpu_custom_call.1} parent=1 // pred_check
      _
    $region19: #{tpu_custom_call.1} parent=1 // pred_check_branch
      %33 = sbr.rel (0) target = $region21
    $region20: #{tpu_custom_call.1} parent=1 // pred_region
      _
    $region21: #{tpu_custom_call.1} parent=1 // pred_fallthru
      _
    // Predicated region
    $region22: #{tpu_custom_call.1} parent=1 // pred_check
      _
    $region23: #{tpu_custom_call.1} parent=1 // pred_check_branch
      %35 = sbr.rel (0) target = $region25
    $region24: #{tpu_custom_call.1} parent=1 // pred_region
      _
    $region25: #{tpu_custom_call.1} parent=1 // pred_fallthru
      _
    // Predicated region
    $region26: #{tpu_custom_call.1} parent=1 // pred_check
      _
    $region27: #{tpu_custom_call.1} parent=1 // pred_check_branch
      %37 = sbr.rel (0) target = $region29
    $region28: #{tpu_custom_call.1} parent=1 // pred_region
      %39 = dma.done [#allocation5], 256
    $region29: #{tpu_custom_call.1} parent=1 // pred_fallthru
      _
    %v40 = vld [vmem:[%s0] sm:$0xff]
    %v41 = vld [vmem:[%s0 + $0x8] sm:$0xff]
    %v42 = vld [vmem:[#allocation4] sm:$0xff]
    %v43 = vld [vmem:[#allocation4 + $0x8] sm:$0xff]
    %v44 = vld [vmem:[%s3] sm:$0x1]
    %v46 = vperm.slane %v44, 0
    %vm48 = vcmask 130048
    %v50 = vsel %vm48, %v40, 0
    %v53 = vsel %vm48, %v41, 0
    %55 = vmatpush.msra.mxu0 0.0
    %56 = vmatpush.msra.mxu0 0.0
    %57 = vmatpush.msra.mxu0 0.0
    %58 = vmatpush.msra.mxu0 0.0
    %59 = vmatpush.msra.mxu0 0.0
    %60 = vmatpush.msra.mxu0 0.0
    %61 = vmatpush.msra.mxu0 0.0
    %62 = vmatpush.msra.mxu0 0.0
    %63 = vmatpush.msra.mxu0 0.0
    %64 = vmatpush.msra.mxu0 0.0
    %65 = vmatpush.msra.mxu0 0.0
    %66 = vmatpush.msra.mxu0 0.0
    %67 = vmatpush.msra.mxu0 0.0
    %68 = vmatpush.msra.mxu0 0.0
    %69 = vmatpush.msra.mxu0 %v43
    %70 = vmatpush.msra.mxu0 %v42
    %71 = vmatmul.f32.gmra.mxu0 %v50
    %v72 = vpop.f32.mrf.mxu0
    %v73 = vadd.f32 %v46, %v72
    %74 = vmatmul.f32.gmra.mxu0 %v53
    %v75 = vpop.f32.mrf.mxu0
    %v76 = vadd.f32 %v46, %v75
    %77 = vdwg.mxu0
    %78 = vst [vmem:[#allocation2] sm:$0xff] %v73
    %79 = vst [vmem:[#allocation2 + $0x8] sm:$0xff] %v76
    %v80 = vld [vmem:[%s2] sm:$0xff]
    %v81 = vld [vmem:[%s2 + $0x8] sm:$0xff]
    %v82 = vld [vmem:[%s2 + $0x10] sm:$0xff]
    %v83 = vld [vmem:[%s2 + $0x18] sm:$0xff]
    %v84 = vlaneseq
    %v85 = vand.u32 %v84, 127
    %vm86 = vcmp.ge.s32.totalorder %v85, 64
    %vm87 = vcmp.lt.s32.totalorder %v85, 96
    %vm88 = vmand %vm86, %vm87
    %v89 = vld [vmem:[#allocation2] sm:$0x3]
    %vm90 = vcmask 261120
    %v92 = vsel %vm90, 0.0, 0
    %94 = vmatpush.msra.mxu0 0.0
    %95 = vmatpush.msra.mxu0 0.0
    %96 = vmatpush.msra.mxu0 0.0
    %97 = vmatpush.msra.mxu0 0.0
    %98 = vmatpush.msra.mxu0 0.0
    %99 = vmatpush.msra.mxu0 0.0
    %100 = vmatpush.msra.mxu0 0.0
    %101 = vmatpush.msra.mxu0 0.0
    %102 = vmatpush.msra.mxu0 0.0
    %103 = vmatpush.msra.mxu0 0.0
    %104 = vmatpush.msra.mxu0 0.0
    %105 = vmatpush.msra.mxu0 0.0
    %106 = vmatpush.msra.mxu0 %v83
    %107 = vmatpush.msra.mxu0 %v82
    %108 = vmatpush.msra.mxu0 %v81
    %109 = vmatpush.msra.mxu0 %v80
    %110 = vmatmul.f32.gmra.mxu0 %v92
    %v111 = vpop.f32.mrf.mxu0
    %v112 = vadd.f32 0.0, %v111
    %113 = vdwg.mxu0
    %v114 = vadd.f32 %v89, %v112
    %v115 = vtanh.pop %v114
    %v116 = vxor.u32 %v114, 2147483648
    %v117 = vmul.f32 %v116, 1.442695
    %v118 = vpow.pop %v117
    %v119 = vadd.f32 %v118, 1.0
    %v120 = vrcp.pop %v119
    %v121 = vmul.f32 %v119, %v120
    %v122 = vsub.f32 1.0, %v121
    %v123 = vmul.f32 %v120, %v122
    %v124 = vadd.f32 %v120, %v123
    %vm125 = vweird.f32 %v119
    %vm126 = vweird.f32 %v120
    %vm127 = vmor %vm125, %vm126
    %v128 = vsel %vm127, %v120, %v124
    %v129 = vand.u32 2147483647, %v119
    %vm130 = vcmp.eq.f32.partialorder %v129, 8.507059e+37
    %v131 = vand.u32 %v119, 2147483648
    %v132 = vor.u32 1.1754944e-38, %v131
    %v133 = vsel %vm130, %v132, %v128
    %v134 = vmul.f32 1.0, %v133
    %v135 = vsel %vm88, %v115, %v134
    %v136 = vmul.f32 %v135, 0.0
    %138 = vrot.lane.b32.xlu0 %v135, 64
    %v139 = vpop.permute.xlu0 %138
    %v141 = vmul.f32 %v135, %v139
    %143 = vrot.lane.b32.xlu0 %v141, 32
    %v144 = vpop.permute.xlu0 %143
    %v146 = vadd.f32 %v136, %v144
    %v147 = vtanh.pop %v146
    %149 = vrot.lane.b32.xlu0 %v147, 64
    %v150 = vpop.permute.xlu0 %149
    %v152 = vmul.f32 %v135, %v150
    %154 = vrot.lane.b32.xlu0 %v152, 32
    %v155 = vpop.permute.xlu0 %154
    %vm157 = vcmask 254976
    %158 = vst.msk [vmem:[#allocation3] sm:$0x3] %vm157, %v155
    %s159 = scalar_lea.vmem [#allocation2], 2
    %v160 = vld [vmem:[%s159] sm:$0x3]
    %v161 = vsel %vm90, %v155, 0
    %163 = vmatpush.msra.mxu0 0.0
    %164 = vmatpush.msra.mxu0 0.0
    %165 = vmatpush.msra.mxu0 0.0
    %166 = vmatpush.msra.mxu0 0.0
    %167 = vmatpush.msra.mxu0 0.0
    %168 = vmatpush.msra.mxu0 0.0
    %169 = vmatpush.msra.mxu0 0.0
    %170 = vmatpush.msra.mxu0 0.0
    %171 = vmatpush.msra.mxu0 0.0
    %172 = vmatpush.msra.mxu0 0.0
    %173 = vmatpush.msra.mxu0 0.0
    %174 = vmatpush.msra.mxu0 0.0
    %175 = vmatpush.msra.mxu0 %v83
    %176 = vmatpush.msra.mxu0 %v82
    %177 = vmatpush.msra.mxu0 %v81
    %178 = vmatpush.msra.mxu0 %v80
    %179 = vmatmul.f32.gmra.mxu0 %v161
    %v180 = vpop.f32.mrf.mxu0
    %v181 = vadd.f32 0.0, %v180
    %182 = vdwg.mxu0
    %v183 = vadd.f32 %v160, %v181
    %v184 = vtanh.pop %v183
    %v185 = vxor.u32 %v183, 2147483648
    %v186 = vmul.f32 %v185, 1.442695
    %v187 = vpow.pop %v186
    %v188 = vadd.f32 %v187, 1.0
    %v189 = vrcp.pop %v188
    %v190 = vmul.f32 %v188, %v189
    %v191 = vsub.f32 1.0, %v190
    %v192 = vmul.f32 %v189, %v191
    %v193 = vadd.f32 %v189, %v192
    %vm194 = vweird.f32 %v188
    %vm195 = vweird.f32 %v189
    %vm196 = vmor %vm194, %vm195
    %v197 = vsel %vm196, %v189, %v193
    %v198 = vand.u32 2147483647, %v188
    %vm199 = vcmp.eq.f32.partialorder %v198, 8.507059e+37
    %v200 = vand.u32 %v188, 2147483648
    %v201 = vor.u32 1.1754944e-38, %v200
    %v202 = vsel %vm199, %v201, %v197
    %v203 = vmul.f32 1.0, %v202
    %v204 = vsel %vm88, %v184, %v203
    %v205 = vmul.f32 %v204, %v146
    %207 = vrot.lane.b32.xlu0 %v204, 64
    %v208 = vpop.permute.xlu0 %207
    %v210 = vmul.f32 %v204, %v208
    %212 = vrot.lane.b32.xlu0 %v210, 32
    %v213 = vpop.permute.xlu0 %212
    %v215 = vadd.f32 %v205, %v213
    %v216 = vtanh.pop %v215
    %218 = vrot.lane.b32.xlu0 %v216, 64
    %v219 = vpop.permute.xlu0 %218
    %v221 = vmul.f32 %v204, %v219
    %223 = vrot.lane.b32.xlu0 %v221, 32
    %v224 = vpop.permute.xlu0 %223
    %s226 = scalar_lea.vmem [#allocation3], 2
    %227 = vst.msk [vmem:[%s226] sm:$0x3] %vm157, %v224
    %s228 = scalar_lea.vmem [#allocation2], 4
    %v229 = vld [vmem:[%s228] sm:$0x3]
    %v230 = vsel %vm90, %v224, 0
    %232 = vmatpush.msra.mxu0 0.0
    %233 = vmatpush.msra.mxu0 0.0
    %234 = vmatpush.msra.mxu0 0.0
    %235 = vmatpush.msra.mxu0 0.0
    %236 = vmatpush.msra.mxu0 0.0
    %237 = vmatpush.msra.mxu0 0.0
    %238 = vmatpush.msra.mxu0 0.0
    %239 = vmatpush.msra.mxu0 0.0
    %240 = vmatpush.msra.mxu0 0.0
    %241 = vmatpush.msra.mxu0 0.0
    %242 = vmatpush.msra.mxu0 0.0
    %243 = vmatpush.msra.mxu0 0.0
    %244 = vmatpush.msra.mxu0 %v83
    %245 = vmatpush.msra.mxu0 %v82
    %246 = vmatpush.msra.mxu0 %v81
    %247 = vmatpush.msra.mxu0 %v80
    %248 = vmatmul.f32.gmra.mxu0 %v230
    %v249 = vpop.f32.mrf.mxu0
    %v250 = vadd.f32 0.0, %v249
    %251 = vdwg.mxu0
    %v252 = vadd.f32 %v229, %v250
    %v253 = vtanh.pop %v252
    %v254 = vxor.u32 %v252, 2147483648
    %v255 = vmul.f32 %v254, 1.442695
    %v256 = vpow.pop %v255
    %v257 = vadd.f32 %v256, 1.0
    %v258 = vrcp.pop %v257
    %v259 = vmul.f32 %v257, %v258
    %v260 = vsub.f32 1.0, %v259
    %v261 = vmul.f32 %v258, %v260
    %v262 = vadd.f32 %v258, %v261
    %vm263 = vweird.f32 %v257
    %vm264 = vweird.f32 %v258
    %vm265 = vmor %vm263, %vm264
    %v266 = vsel %vm265, %v258, %v262
    %v267 = vand.u32 2147483647, %v257
    %vm268 = vcmp.eq.f32.partialorder %v267, 8.507059e+37
    %v269 = vand.u32 %v257, 2147483648
    %v270 = vor.u32 1.1754944e-38, %v269
    %v271 = vsel %vm268, %v270, %v266
    %v272 = vmul.f32 1.0, %v271
    %v273 = vsel %vm88, %v253, %v272
    %v274 = vmul.f32 %v273, %v215
    %276 = vrot.lane.b32.xlu0 %v273, 64
    %v277 = vpop.permute.xlu0 %276
    %v279 = vmul.f32 %v273, %v277
    %281 = vrot.lane.b32.xlu0 %v279, 32
    %v282 = vpop.permute.xlu0 %281
    %v284 = vadd.f32 %v274, %v282
    %v285 = vtanh.pop %v284
    %287 = vrot.lane.b32.xlu0 %v285, 64
    %v288 = vpop.permute.xlu0 %287
    %v290 = vmul.f32 %v273, %v288
    %292 = vrot.lane.b32.xlu0 %v290, 32
    %v293 = vpop.permute.xlu0 %292
    %s295 = scalar_lea.vmem [#allocation3], 4
    %296 = vst.msk [vmem:[%s295] sm:$0x3] %vm157, %v293
    %s297 = scalar_lea.vmem [#allocation2], 6
    %v298 = vld [vmem:[%s297] sm:$0x3]
    %v299 = vsel %vm90, %v293, 0
    %301 = vmatpush.msra.mxu0 0.0
    %302 = vmatpush.msra.mxu0 0.0
    %303 = vmatpush.msra.mxu0 0.0
    %304 = vmatpush.msra.mxu0 0.0
    %305 = vmatpush.msra.mxu0 0.0
    %306 = vmatpush.msra.mxu0 0.0
    %307 = vmatpush.msra.mxu0 0.0
    %308 = vmatpush.msra.mxu0 0.0
    %309 = vmatpush.msra.mxu0 0.0
    %310 = vmatpush.msra.mxu0 0.0
    %311 = vmatpush.msra.mxu0 0.0
    %312 = vmatpush.msra.mxu0 0.0
    %313 = vmatpush.msra.mxu0 %v83
    %314 = vmatpush.msra.mxu0 %v82
    %315 = vmatpush.msra.mxu0 %v81
    %316 = vmatpush.msra.mxu0 %v80
    %317 = vmatmul.f32.gmra.mxu0 %v299
    %v318 = vpop.f32.mrf.mxu0
    %v319 = vadd.f32 0.0, %v318
    %320 = vdwg.mxu0
    %v321 = vadd.f32 %v298, %v319
    %v322 = vtanh.pop %v321
    %v323 = vxor.u32 %v321, 2147483648
    %v324 = vmul.f32 %v323, 1.442695
    %v325 = vpow.pop %v324
    %v326 = vadd.f32 %v325, 1.0
    %v327 = vrcp.pop %v326
    %v328 = vmul.f32 %v326, %v327
    %v329 = vsub.f32 1.0, %v328
    %v330 = vmul.f32 %v327, %v329
    %v331 = vadd.f32 %v327, %v330
    %vm332 = vweird.f32 %v326
    %vm333 = vweird.f32 %v327
    %vm334 = vmor %vm332, %vm333
    %v335 = vsel %vm334, %v327, %v331
    %v336 = vand.u32 2147483647, %v326
    %vm337 = vcmp.eq.f32.partialorder %v336, 8.507059e+37
    %v338 = vand.u32 %v326, 2147483648
    %v339 = vor.u32 1.1754944e-38, %v338
    %v340 = vsel %vm337, %v339, %v335
    %v341 = vmul.f32 1.0, %v340
    %v342 = vsel %vm88, %v322, %v341
    %v343 = vmul.f32 %v342, %v284
    %345 = vrot.lane.b32.xlu0 %v342, 64
    %v346 = vpop.permute.xlu0 %345
    %v348 = vmul.f32 %v342, %v346
    %350 = vrot.lane.b32.xlu0 %v348, 32
    %v351 = vpop.permute.xlu0 %350
    %v353 = vadd.f32 %v343, %v351
    %v354 = vtanh.pop %v353
    %356 = vrot.lane.b32.xlu0 %v354, 64
    %v357 = vpop.permute.xlu0 %356
    %v359 = vmul.f32 %v342, %v357
    %361 = vrot.lane.b32.xlu0 %v359, 32
    %v362 = vpop.permute.xlu0 %361
    %s364 = scalar_lea.vmem [#allocation3], 6
    %365 = vst.msk [vmem:[%s364] sm:$0x3] %vm157, %v362
    %s366 = scalar_lea.vmem [#allocation2], 8
    %v367 = vld [vmem:[%s366] sm:$0x3]
    %v368 = vsel %vm90, %v362, 0
    %370 = vmatpush.msra.mxu0 0.0
    %371 = vmatpush.msra.mxu0 0.0
    %372 = vmatpush.msra.mxu0 0.0
    %373 = vmatpush.msra.mxu0 0.0
    %374 = vmatpush.msra.mxu0 0.0
    %375 = vmatpush.msra.mxu0 0.0
    %376 = vmatpush.msra.mxu0 0.0
    %377 = vmatpush.msra.mxu0 0.0
    %378 = vmatpush.msra.mxu0 0.0
    %379 = vmatpush.msra.mxu0 0.0
    %380 = vmatpush.msra.mxu0 0.0
    %381 = vmatpush.msra.mxu0 0.0
    %382 = vmatpush.msra.mxu0 %v83
    %383 = vmatpush.msra.mxu0 %v82
    %384 = vmatpush.msra.mxu0 %v81
    %385 = vmatpush.msra.mxu0 %v80
    %386 = vmatmul.f32.gmra.mxu0 %v368
    %v387 = vpop.f32.mrf.mxu0
    %v388 = vadd.f32 0.0, %v387
    %389 = vdwg.mxu0
    %v390 = vadd.f32 %v367, %v388
    %v391 = vtanh.pop %v390
    %v392 = vxor.u32 %v390, 2147483648
    %v393 = vmul.f32 %v392, 1.442695
    %v394 = vpow.pop %v393
    %v395 = vadd.f32 %v394, 1.0
    %v396 = vrcp.pop %v395
    %v397 = vmul.f32 %v395, %v396
    %v398 = vsub.f32 1.0, %v397
    %v399 = vmul.f32 %v396, %v398
    %v400 = vadd.f32 %v396, %v399
    %vm401 = vweird.f32 %v395
    %vm402 = vweird.f32 %v396
    %vm403 = vmor %vm401, %vm402
    %v404 = vsel %vm403, %v396, %v400
    %v405 = vand.u32 2147483647, %v395
    %vm406 = vcmp.eq.f32.partialorder %v405, 8.507059e+37
    %v407 = vand.u32 %v395, 2147483648
    %v408 = vor.u32 1.1754944e-38, %v407
    %v409 = vsel %vm406, %v408, %v404
    %v410 = vmul.f32 1.0, %v409
    %v411 = vsel %vm88, %v391, %v410
    %v412 = vmul.f32 %v411, %v353
    %414 = vrot.lane.b32.xlu0 %v411, 64
    %v415 = vpop.permute.xlu0 %414
    %v417 = vmul.f32 %v411, %v415
    %419 = vrot.lane.b32.xlu0 %v417, 32
    %v420 = vpop.permute.xlu0 %419
    %v422 = vadd.f32 %v412, %v420
    %v423 = vtanh.pop %v422
    %425 = vrot.lane.b32.xlu0 %v423, 64
    %v426 = vpop.permute.xlu0 %425
    %v428 = vmul.f32 %v411, %v426
    %430 = vrot.lane.b32.xlu0 %v428, 32
    %v431 = vpop.permute.xlu0 %430
    %s433 = scalar_lea.vmem [#allocation3], 8
    %434 = vst.msk [vmem:[%s433] sm:$0x3] %vm157, %v431
    %s435 = scalar_lea.vmem [#allocation2], 10
    %v436 = vld [vmem:[%s435] sm:$0x3]
    %v437 = vsel %vm90, %v431, 0
    %439 = vmatpush.msra.mxu0 0.0
    %440 = vmatpush.msra.mxu0 0.0
    %441 = vmatpush.msra.mxu0 0.0
    %442 = vmatpush.msra.mxu0 0.0
    %443 = vmatpush.msra.mxu0 0.0
    %444 = vmatpush.msra.mxu0 0.0
    %445 = vmatpush.msra.mxu0 0.0
    %446 = vmatpush.msra.mxu0 0.0
    %447 = vmatpush.msra.mxu0 0.0
    %448 = vmatpush.msra.mxu0 0.0
    %449 = vmatpush.msra.mxu0 0.0
    %450 = vmatpush.msra.mxu0 0.0
    %451 = vmatpush.msra.mxu0 %v83
    %452 = vmatpush.msra.mxu0 %v82
    %453 = vmatpush.msra.mxu0 %v81
    %454 = vmatpush.msra.mxu0 %v80
    %455 = vmatmul.f32.gmra.mxu0 %v437
    %v456 = vpop.f32.mrf.mxu0
    %v457 = vadd.f32 0.0, %v456
    %458 = vdwg.mxu0
    %v459 = vadd.f32 %v436, %v457
    %v460 = vtanh.pop %v459
    %v461 = vxor.u32 %v459, 2147483648
    %v462 = vmul.f32 %v461, 1.442695
    %v463 = vpow.pop %v462
    %v464 = vadd.f32 %v463, 1.0
    %v465 = vrcp.pop %v464
    %v466 = vmul.f32 %v464, %v465
    %v467 = vsub.f32 1.0, %v466
    %v468 = vmul.f32 %v465, %v467
    %v469 = vadd.f32 %v465, %v468
    %vm470 = vweird.f32 %v464
    %vm471 = vweird.f32 %v465
    %vm472 = vmor %vm470, %vm471
    %v473 = vsel %vm472, %v465, %v469
    %v474 = vand.u32 2147483647, %v464
    %vm475 = vcmp.eq.f32.partialorder %v474, 8.507059e+37
    %v476 = vand.u32 %v464, 2147483648
    %v477 = vor.u32 1.1754944e-38, %v476
    %v478 = vsel %vm475, %v477, %v473
    %v479 = vmul.f32 1.0, %v478
    %v480 = vsel %vm88, %v460, %v479
    %v481 = vmul.f32 %v480, %v422
    %483 = vrot.lane.b32.xlu0 %v480, 64
    %v484 = vpop.permute.xlu0 %483
    %v486 = vmul.f32 %v480, %v484
    %488 = vrot.lane.b32.xlu0 %v486, 32
    %v489 = vpop.permute.xlu0 %488
    %v491 = vadd.f32 %v481, %v489
    %v492 = vtanh.pop %v491
    %494 = vrot.lane.b32.xlu0 %v492, 64
    %v495 = vpop.permute.xlu0 %494
    %v497 = vmul.f32 %v480, %v495
    %499 = vrot.lane.b32.xlu0 %v497, 32
    %v500 = vpop.permute.xlu0 %499
    %s502 = scalar_lea.vmem [#allocation3], 10
    %503 = vst.msk [vmem:[%s502] sm:$0x3] %vm157, %v500
    %s504 = scalar_lea.vmem [#allocation2], 12
    %v505 = vld [vmem:[%s504] sm:$0x3]
    %v506 = vsel %vm90, %v500, 0
    %508 = vmatpush.msra.mxu0 0.0
    %509 = vmatpush.msra.mxu0 0.0
    %510 = vmatpush.msra.mxu0 0.0
    %511 = vmatpush.msra.mxu0 0.0
    %512 = vmatpush.msra.mxu0 0.0
    %513 = vmatpush.msra.mxu0 0.0
    %514 = vmatpush.msra.mxu0 0.0
    %515 = vmatpush.msra.mxu0 0.0
    %516 = vmatpush.msra.mxu0 0.0
    %517 = vmatpush.msra.mxu0 0.0
    %518 = vmatpush.msra.mxu0 0.0
    %519 = vmatpush.msra.mxu0 0.0
    %520 = vmatpush.msra.mxu0 %v83
    %521 = vmatpush.msra.mxu0 %v82
    %522 = vmatpush.msra.mxu0 %v81
    %523 = vmatpush.msra.mxu0 %v80
    %524 = vmatmul.f32.gmra.mxu0 %v506
    %v525 = vpop.f32.mrf.mxu0
    %v526 = vadd.f32 0.0, %v525
    %527 = vdwg.mxu0
    %v528 = vadd.f32 %v505, %v526
    %v529 = vtanh.pop %v528
    %v530 = vxor.u32 %v528, 2147483648
    %v531 = vmul.f32 %v530, 1.442695
    %v532 = vpow.pop %v531
    %v533 = vadd.f32 %v532, 1.0
    %v534 = vrcp.pop %v533
    %v535 = vmul.f32 %v533, %v534
    %v536 = vsub.f32 1.0, %v535
    %v537 = vmul.f32 %v534, %v536
    %v538 = vadd.f32 %v534, %v537
    %vm539 = vweird.f32 %v533
    %vm540 = vweird.f32 %v534
    %vm541 = vmor %vm539, %vm540
    %v542 = vsel %vm541, %v534, %v538
    %v543 = vand.u32 2147483647, %v533
    %vm544 = vcmp.eq.f32.partialorder %v543, 8.507059e+37
    %v545 = vand.u32 %v533, 2147483648
    %v546 = vor.u32 1.1754944e-38, %v545
    %v547 = vsel %vm544, %v546, %v542
    %v548 = vmul.f32 1.0, %v547
    %v549 = vsel %vm88, %v529, %v548
    %v550 = vmul.f32 %v549, %v491
    %552 = vrot.lane.b32.xlu0 %v549, 64
    %v553 = vpop.permute.xlu0 %552
    %v555 = vmul.f32 %v549, %v553
    %557 = vrot.lane.b32.xlu0 %v555, 32
    %v558 = vpop.permute.xlu0 %557
    %v560 = vadd.f32 %v550, %v558
    %v561 = vtanh.pop %v560
    %563 = vrot.lane.b32.xlu0 %v561, 64
    %v564 = vpop.permute.xlu0 %563
    %v566 = vmul.f32 %v549, %v564
    %568 = vrot.lane.b32.xlu0 %v566, 32
    %v569 = vpop.permute.xlu0 %568
    %s571 = scalar_lea.vmem [#allocation3], 12
    %572 = vst.msk [vmem:[%s571] sm:$0x3] %vm157, %v569
    %s573 = scalar_lea.vmem [#allocation2], 14
    %v574 = vld [vmem:[%s573] sm:$0x3]
    %v575 = vsel %vm90, %v569, 0
    %577 = vmatpush.msra.mxu0 0.0
    %578 = vmatpush.msra.mxu0 0.0
    %579 = vmatpush.msra.mxu0 0.0
    %580 = vmatpush.msra.mxu0 0.0
    %581 = vmatpush.msra.mxu0 0.0
    %582 = vmatpush.msra.mxu0 0.0
    %583 = vmatpush.msra.mxu0 0.0
    %584 = vmatpush.msra.mxu0 0.0
    %585 = vmatpush.msra.mxu0 0.0
    %586 = vmatpush.msra.mxu0 0.0
    %587 = vmatpush.msra.mxu0 0.0
    %588 = vmatpush.msra.mxu0 0.0
    %589 = vmatpush.msra.mxu0 %v83
    %590 = vmatpush.msra.mxu0 %v82
    %591 = vmatpush.msra.mxu0 %v81
    %592 = vmatpush.msra.mxu0 %v80
    %593 = vmatmul.f32.gmra.mxu0 %v575
    %v594 = vpop.f32.mrf.mxu0
    %v595 = vadd.f32 0.0, %v594
    %596 = vdwg.mxu0
    %v597 = vadd.f32 %v574, %v595
    %v598 = vtanh.pop %v597
    %v599 = vxor.u32 %v597, 2147483648
    %v600 = vmul.f32 %v599, 1.442695
    %v601 = vpow.pop %v600
    %v602 = vadd.f32 %v601, 1.0
    %v603 = vrcp.pop %v602
    %v604 = vmul.f32 %v602, %v603
    %v605 = vsub.f32 1.0, %v604
    %v606 = vmul.f32 %v603, %v605
    %v607 = vadd.f32 %v603, %v606
    %vm608 = vweird.f32 %v602
    %vm609 = vweird.f32 %v603
    %vm610 = vmor %vm608, %vm609
    %v611 = vsel %vm610, %v603, %v607
    %v612 = vand.u32 2147483647, %v602
    %vm613 = vcmp.eq.f32.partialorder %v612, 8.507059e+37
    %v614 = vand.u32 %v602, 2147483648
    %v615 = vor.u32 1.1754944e-38, %v614
    %v616 = vsel %vm613, %v615, %v611
    %v617 = vmul.f32 1.0, %v616
    %v618 = vsel %vm88, %v598, %v617
    %v619 = vmul.f32 %v618, %v560
    %621 = vrot.lane.b32.xlu0 %v618, 64
    %v622 = vpop.permute.xlu0 %621
    %v624 = vmul.f32 %v618, %v622
    %626 = vrot.lane.b32.xlu0 %v624, 32
    %v627 = vpop.permute.xlu0 %626
    %v629 = vadd.f32 %v619, %v627
    %v630 = vtanh.pop %v629
    %632 = vrot.lane.b32.xlu0 %v630, 64
    %v633 = vpop.permute.xlu0 %632
    %v635 = vmul.f32 %v618, %v633
    %637 = vrot.lane.b32.xlu0 %v635, 32
    %v638 = vpop.permute.xlu0 %637
    %s640 = scalar_lea.vmem [#allocation3], 14
    %641 = vst.msk [vmem:[%s640] sm:$0x3] %vm157, %v638
    %v642 = vld [vmem:[#allocation3] sm:$0xff]
    %v643 = vld [vmem:[#allocation3 + $0x8] sm:$0xff]
    %v644 = vld [vmem:[%s4] sm:$0xff]
    %v645 = vld [vmem:[%s4 + $0x8] sm:$0xff]
    %v646 = vld [vmem:[%s4 + $0x10] sm:$0xff]
    %v647 = vld [vmem:[%s4 + $0x18] sm:$0xff]
    %v648 = vld [vmem:[%s5] sm:$0x1]
    %v650 = vperm.slane %v648, 0
    %v653 = vsel %vm90, %v642, 0
    %v656 = vsel %vm90, %v643, 0
    %658 = vmatpush.msra.mxu0 0.0
    %659 = vmatpush.msra.mxu0 0.0
    %660 = vmatpush.msra.mxu0 0.0
    %661 = vmatpush.msra.mxu0 0.0
    %662 = vmatpush.msra.mxu0 0.0
    %663 = vmatpush.msra.mxu0 0.0
    %664 = vmatpush.msra.mxu0 0.0
    %665 = vmatpush.msra.mxu0 0.0
    %666 = vmatpush.msra.mxu0 0.0
    %667 = vmatpush.msra.mxu0 0.0
    %668 = vmatpush.msra.mxu0 0.0
    %669 = vmatpush.msra.mxu0 0.0
    %670 = vmatpush.msra.mxu0 %v647
    %671 = vmatpush.msra.mxu0 %v646
    %672 = vmatpush.msra.mxu0 %v645
    %673 = vmatpush.msra.mxu0 %v644
    %674 = vmatmul.f32.gmra.mxu0 %v653
    %v675 = vpop.f32.mrf.mxu0
    %v676 = vadd.f32 %v650, %v675
    %677 = vmatmul.f32.gmra.mxu0 %v656
    %v678 = vpop.f32.mrf.mxu0
    %v679 = vadd.f32 %v650, %v678
    %680 = vdwg.mxu0
    %681 = vst.msk [vmem:[#allocation7] sm:$0xff] %vm48, %v676
    %682 = vst.msk [vmem:[#allocation7 + $0x8] sm:$0xff] %vm48, %v679
    // Predicated region
    $region30: #{tpu_custom_call.1} parent=1 // pred_check
      _
    $region31: #{tpu_custom_call.1} parent=1 // pred_check_branch
      %684 = sbr.rel (0) target = $region33
    $region32: #{tpu_custom_call.1} parent=1 // pred_region
      %686 = vsyncadd [#allocation6], 0
      %s687 = sshll.u32 [#allocation7], 4
      %s688 = int_to_ptr.vmem [resolvable:$true] %s687
      %s689 = sshll.u32 %s6, 4
      %s690 = int_to_ptr.hbm [resolvable:$true] %s689
      %695 = dma.vmem_to_hbm [thread:$0]  %s688, 256, %s690, [#allocation6], 128, 128, 8
    $region33: #{tpu_custom_call.1} parent=1 // pred_fallthru
      _
    // Predicated region
    $region34: #{tpu_custom_call.1} parent=1 // pred_check
      _
    $region35: #{tpu_custom_call.1} parent=1 // pred_check_branch
      %697 = sbr.rel (0) target = $region37
    $region36: #{tpu_custom_call.1} parent=1 // pred_region
      %699 = dma.done [#allocation6], 256
    $region37: #{tpu_custom_call.1} parent=1 // pred_fallthru
      _
    %700 = vsyncpa [#allocation5], 1
    %701 = vsyncpa [#allocation6], 1

</llo_original>
